<compile_context>
chip_gen: v7x
topology: tpu7x:2x2x1
jax: 0.10.0
libtpu: 0.0.40
codegen_flags: <defaults>
</compile_context>

<pallas_src>
import functools

import jax
import jax.numpy as jnp
from jax import lax
from jax.experimental import pallas as pl
from jax.experimental.pallas import tpu as pltpu


def _round_up(a, m):
    return (a + m - 1) // m * m


def _vmem_capacity_bytes():
    """Physical VMEM per TensorCore; conservative fallback if the query fails."""
    try:
        info = pltpu.get_tpu_info()
        cap = getattr(info, "vmem_capacity_bytes", None)
        if cap:
            return int(cap)
    except Exception:
        pass
    return 64 * 1024 * 1024  # assume v7x-class (64 MiB) when unknown


def _choose_tiling(bc, n, in_bytes, out_bytes):
    """Pick the row-tile size and an explicit vmem limit for the current chip."""
    n_lanes = _round_up(max(n, 1), 128)      # lane padding of a (rows, n) block in VMEM
    cap = _vmem_capacity_bytes()

    if cap >= 96 * 1024 * 1024:              # v5e / v6e: 128 MiB physical VMEM
        x_block_target = 6 * 1024 * 1024     # big tiles amortize ~0.35us/step overhead
    else:                                    # v7x: only 64 MiB physical VMEM
        x_block_target = 2 * 1024 * 1024 + 512 * 1024

    rows = max(8, min(512, (x_block_target // (n_lanes * 4)) // 8 * 8))

    if bc <= 8:
        rows = bc                            # single full-dim row block
    else:
        # Guarantee >= 2 grid steps so "parallel" can shard across v7x's 2 TCs.
        rows = min(rows, max(8, _round_up(-(-bc // 2), 8)))

    # VMEM budget: double-buffered in + out blocks plus ~3 block-sized f32 temps
    # (xf / centered / keys peak) held inside the kernel.
    per_row = n_lanes * (2 * in_bytes + 2 * out_bytes + 3 * 4)
    est = rows * per_row
    usable = int(0.85 * cap)
    while rows > 8 and est > usable:
        rows = max(8, (rows // 2) // 8 * 8)
        est = rows * per_row
    if est > usable:
        # TODO(synk): stream the spatial dim in chunks (persistent key scratch) for
        # extremely large H*W instead of erroring out.
        raise ValueError(
            f"SRMWithMedian kernel: H*W={n} too large to keep one row tile resident "
            f"in VMEM ({est} bytes needed, ~{usable} usable on this chip).")

    vmem_limit = min(max(int(est * 1.25), 32 * 1024 * 1024), int(0.9 * cap))
    return rows, vmem_limit


def _srm_kernel(x_ref, p_ref, y_ref, *, n_bits, low_fill):
    # x_ref: (R, N) input rows           p_ref: (R, 4) [w0*s, w1*s, w2*s, shift]
    # y_ref: (R, N) output rows
    n = x_ref.shape[-1]
    inv_n = 1.0 / n

    xf = x_ref[...].astype(jnp.float32)                          # (R, N)

    # ---- mean + unbiased std (two-pass: robust to |mean| >> std) ----
    mean = jnp.sum(xf, axis=-1, keepdims=True) * inv_n           # (R, 1)
    if n > 1:
        cen = xf - mean
        var = jnp.sum(cen * cen, axis=-1, keepdims=True) * (1.0 / (n - 1))
        std = jnp.sqrt(jnp.maximum(var, 0.0))
    else:
        std = jnp.full_like(mean, jnp.nan)                       # torch: std of 1 elem = NaN

    # ---- exact lower median (torch.median) via bitwise radix-select --------------
    # Order-preserving map f32 -> int32 (monotone; same map inverts it).
    xi = pltpu.bitcast(xf, jnp.int32)
    keys = jnp.where(xi < 0, xi ^ jnp.int32(0x7FFFFFFF), xi)
    # `xf`/`cen` are dead from here on; only `keys` stays live across the loop
    # (the final rescale re-reads x_ref), keeping one block-sized temp resident.

    k = (n - 1) // 2          # 0-based rank of the lower median
    kf = float(k)             # counts are sums of 0/1 -> exact in f32 for n < 2**24
                              # (host wrapper enforces that bound explicitly)

    # Sign bit: the median is negative iff more than k keys are negative.
    cnt_neg = jnp.sum((keys < 0).astype(jnp.float32), axis=-1, keepdims=True)
    mk0 = jnp.where(cnt_neg > kf, jnp.int32(-(2 ** 31)), jnp.int32(0))   # (R, 1)

    # NOTE(perf-review): offloading this rank count onto the MXU (mask @ ones) was
    # evaluated and rejected — the MXU can only ingest ~256 mask elements/cycle
    # (row feed rate of the systolic array) vs ~4096 accumulate-adds/cycle on the
    # 4 VALU slots, so the matmul would become the new bottleneck.
    def body(_, carry):
        mk, bit = carry
        cand = mk | bit                                          # (R, 1)
        cnt = jnp.sum((keys < cand).astype(jnp.float32), axis=-1, keepdims=True)
        mk = jnp.where(cnt <= kf, cand, mk)
        return mk, jnp.right_shift(bit, 1)

    # Fully unrolled so the LLO scheduler can interleave each bit's compare stream
    # with the previous bit's cross-lane reduce tail (no loop bookkeeping).
    med_key, _ = lax.fori_loop(0, n_bits, body, (mk0, jnp.int32(2 ** 30)),
                               unroll=True)

    if low_fill:
        # bf16/f16-origin values: unsearched low key bits are all 0 for non-negative
        # keys and all 1 for negative keys — reconstruct them from the sign.
        med_key = jnp.where(med_key < 0, med_key | jnp.int32(low_fill), med_key)

    med_i = jnp.where(med_key < 0, med_key ^ jnp.int32(0x7FFFFFFF), med_key)
    median = pltpu.bitcast(med_i, jnp.float32)                   # (R, 1)

    # ---- depthwise Conv1d(k=3) with eval-mode BN folded in, + sigmoid gate ----
    p = p_ref[...].astype(jnp.float32)                           # (R, 4)
    z = p[:, 0:1] * mean + p[:, 1:2] * std + p[:, 2:3] * median + p[:, 3:4]
    g = 1.0 / (1.0 + jnp.exp(-z))                                # (R, 1), EUP exp

    # ---- channel-wise rescale (re-read x_ref; no f32 copy kept live) ----
    y_ref[...] = (x_ref[...].astype(jnp.float32) * g).astype(y_ref.dtype)


def srm_with_median(x, conv_w, bn_gamma, bn_beta, bn_rmean, bn_rvar, eps=1e-5):
    """x: (B, C, H, W). conv_w: (C, 3). bn_*: (C,). Returns same shape/dtype as x."""
    b, c, h, w = x.shape
    n = h * w
    bc = b * c
    if n >= (1 << 24):
        raise ValueError("H*W must be < 2**24 (exactness bound of the f32 rank counts).")

    # Fold eval-mode BatchNorm1d into the depthwise conv: bn(conv(u)) = (w*scale)·u + shift.
    scale = bn_gamma.astype(jnp.float32) / jnp.sqrt(bn_rvar.astype(jnp.float32) + eps)
    shift = bn_beta.astype(jnp.float32) - bn_rmean.astype(jnp.float32) * scale
    wf = conv_w.astype(jnp.float32) * scale[:, None]                       # (C, 3)
    params = jnp.tile(jnp.concatenate([wf, shift[:, None]], -1), (b, 1))   # (BC, 4)

    # Free reshape (no copy) and NO host-side padding: partial edge row-blocks and a
    # full-width lane block are handled by Pallas, so x is read from HBM exactly once
    # and y written exactly once even for non-128-aligned feature maps (7x7, 14x14, ...).
    x_flat = x.reshape(bc, n)

    itemsize = jnp.dtype(x.dtype).itemsize
    rows, vmem_limit = _choose_tiling(bc, n, itemsize, itemsize)

    # bf16/f16-origin activations: the low mantissa bits of the f32 key are zero, so
    # the radix-select only needs the upper bits (15 / 18 instead of 31).
    zero_bits = {jnp.dtype(jnp.bfloat16): 16, jnp.dtype(jnp.float16): 13}.get(
        jnp.dtype(x.dtype), 0)
    n_bits = 31 - zero_bits
    low_fill = (1 << zero_bits) - 1

    kernel = functools.partial(_srm_kernel, n_bits=n_bits, low_fill=low_fill)

    y_flat = pl.pallas_call(
        kernel,
        out_shape=jax.ShapeDtypeStruct((bc, n), x.dtype),
        grid_spec=pltpu.PrefetchScalarGridSpec(
            num_scalar_prefetch=0,
            grid=(pl.cdiv(bc, rows),),
            in_specs=[
                pl.BlockSpec((rows, n), lambda i: (i, 0)),
                pl.BlockSpec((rows, 4), lambda i: (i, 0)),
            ],
            out_specs=pl.BlockSpec((rows, n), lambda i: (i, 0)),
        ),
        compiler_params=pltpu.CompilerParams(
            dimension_semantics=("parallel",),
            vmem_limit_bytes=vmem_limit,
        ),
    )(x_flat, params)

    return y_flat.reshape(b, c, h, w)


def _reference(x, conv_w, bn_gamma, bn_beta, bn_rmean, bn_rvar, eps=1e-5):
    b, c, h, w = x.shape
    n = h * w
    xf = x.reshape(b, c, n).astype(jnp.float32)
    mean = xf.mean(-1)
    std = xf.std(-1, ddof=1)
    med = jnp.sort(xf, axis=-1)[..., (n - 1) // 2]          # torch lower-median
    u = jnp.stack([mean, std, med], axis=-1)                # (b, c, 3)
    z = jnp.einsum("bck,ck->bc", u, conv_w.astype(jnp.float32))
    z = (z - bn_rmean) / jnp.sqrt(bn_rvar + eps) * bn_gamma + bn_beta
    g = jax.nn.sigmoid(z)
    return (x.astype(jnp.float32) * g[:, :, None, None]).astype(x.dtype)


if __name__ == "__main__":
    key = jax.random.PRNGKey(0)
    kx, kw = jax.random.split(key)

    B, C, H, W = 2, 4, 16, 16
    x = jax.random.normal(kx, (B, C, H, W), dtype=jnp.float32)

    # Conv1d(channel, channel, 3, groups=channel, bias=False); BatchNorm1d defaults.
    conv_w = 0.1 * jax.random.normal(kw, (C, 3), dtype=jnp.float32)
    bn_gamma = jnp.ones((C,), jnp.float32)
    bn_beta = jnp.zeros((C,), jnp.float32)
    bn_rmean = jnp.zeros((C,), jnp.float32)
    bn_rvar = jnp.ones((C,), jnp.float32)

    y = srm_with_median(x, conv_w, bn_gamma, bn_beta, bn_rmean, bn_rvar)
    y = jax.block_until_ready(y)

    y_ref = _reference(x, conv_w, bn_gamma, bn_beta, bn_rmean, bn_rvar)
    assert y.shape == (B, C, H, W)
    assert y.dtype == x.dtype
    assert jnp.allclose(y, y_ref, rtol=1e-5, atol=1e-5), "mismatch vs JAX reference"

    print("KERNEL_OK")
</pallas_src>

<mosaic_0001>
module attributes {stable_mosaic.version = 11 : i64} {
  func.func @_srm_kernel(%arg0: i32, %arg1: memref<8x256xf32, #tpu.memory_space<vmem>>, %arg2: memref<8x4xf32, #tpu.memory_space<vmem>>, %arg3: memref<8x256xf32, #tpu.memory_space<vmem>>) attributes {dimension_semantics = [#tpu.dimension_semantics<parallel>], iteration_bounds = array<i64: 1>, scalar_prefetch = 0 : i64, scratch_operands = 0 : i64, tpu.core_type = #tpu.core_type<tc>, window_params = [{transform_indices = @transform_0, window_bounds = array<i64: 8, 256>}, {transform_indices = @transform_1, window_bounds = array<i64: 8, 4>}, {transform_indices = @transform_2, window_bounds = array<i64: 8, 256>}]} {
    %c0 = arith.constant 0 : index
    %c0_0 = arith.constant 0 : index
    %0 = vector.load %arg1[%c0, %c0_0] : memref<8x256xf32, #tpu.memory_space<vmem>>, vector<8x256xf32>
    %cst = arith.constant dense<0.000000e+00> : vector<8xf32>
    %1 = vector.multi_reduction <add>, %0, %cst [1] : vector<8x256xf32> to vector<8xf32>
    %2 = vector.shape_cast %1 : vector<8xf32> to vector<8x1xf32>
    %cst_1 = arith.constant 3.906250e-03 : f32
    %3 = vector.broadcast %cst_1 : f32 to vector<8x1xf32>
    %4 = arith.mulf %2, %3 : vector<8x1xf32>
    %5 = vector.broadcast %4 : vector<8x1xf32> to vector<8x256xf32>
    %6 = arith.subf %0, %5 : vector<8x256xf32>
    %7 = arith.mulf %6, %6 : vector<8x256xf32>
    %cst_2 = arith.constant dense<0.000000e+00> : vector<8xf32>
    %8 = vector.multi_reduction <add>, %7, %cst_2 [1] : vector<8x256xf32> to vector<8xf32>
    %9 = vector.shape_cast %8 : vector<8xf32> to vector<8x1xf32>
    %cst_3 = arith.constant 0.00392156886 : f32
    %10 = vector.broadcast %cst_3 : f32 to vector<8x1xf32>
    %11 = arith.mulf %9, %10 : vector<8x1xf32>
    %cst_4 = arith.constant 0.000000e+00 : f32
    %12 = vector.broadcast %cst_4 : f32 to vector<8x1xf32>
    %13 = arith.maximumf %11, %12 : vector<8x1xf32>
    %14 = math.sqrt %13 : vector<8x1xf32>
    %15 = tpu.bitcast %0 : vector<8x256xf32> -> vector<8x256xi32>
    %c0_i32 = arith.constant 0 : i32
    %16 = vector.broadcast %c0_i32 : i32 to vector<8x256xi32>
    %17 = arith.cmpi slt, %15, %16 : vector<8x256xi32>
    %c2147483647_i32 = arith.constant 2147483647 : i32
    %18 = vector.broadcast %c2147483647_i32 : i32 to vector<8x256xi32>
    %19 = arith.xori %15, %18 : vector<8x256xi32>
    %20 = arith.select %17, %19, %15 : vector<8x256xi1>, vector<8x256xi32>
    %c0_i32_5 = arith.constant 0 : i32
    %21 = vector.broadcast %c0_i32_5 : i32 to vector<8x256xi32>
    %22 = arith.cmpi slt, %20, %21 : vector<8x256xi32>
    %23 = arith.extui %22 : vector<8x256xi1> to vector<8x256xi32>
    %24 = arith.sitofp %23 : vector<8x256xi32> to vector<8x256xf32>
    %cst_6 = arith.constant dense<0.000000e+00> : vector<8xf32>
    %25 = vector.multi_reduction <add>, %24, %cst_6 [1] : vector<8x256xf32> to vector<8xf32>
    %26 = vector.shape_cast %25 : vector<8xf32> to vector<8x1xf32>
    %cst_7 = arith.constant 1.270000e+02 : f32
    %27 = vector.broadcast %cst_7 : f32 to vector<8x1xf32>
    %28 = arith.cmpf ogt, %26, %27 : vector<8x1xf32>
    %c-2147483648_i32 = arith.constant -2147483648 : i32
    %c0_i32_8 = arith.constant 0 : i32
    %29 = vector.broadcast %c-2147483648_i32 : i32 to vector<8x1xi32>
    %30 = vector.broadcast %c0_i32_8 : i32 to vector<8x1xi32>
    %31 = arith.select %28, %29, %30 : vector<8x1xi1>, vector<8x1xi32>
    %c1073741824_i32 = arith.constant 1073741824 : i32
    %c0_i32_9 = arith.constant 0 : i32
    %32 = vector.broadcast %c1073741824_i32 : i32 to vector<8x1xi32>
    %33 = arith.ori %31, %32 : vector<8x1xi32>
    %34 = vector.broadcast %33 : vector<8x1xi32> to vector<8x256xi32>
    %35 = arith.cmpi slt, %20, %34 : vector<8x256xi32>
    %36 = arith.extui %35 : vector<8x256xi1> to vector<8x256xi32>
    %37 = arith.sitofp %36 : vector<8x256xi32> to vector<8x256xf32>
    %cst_10 = arith.constant dense<0.000000e+00> : vector<8xf32>
    %38 = vector.multi_reduction <add>, %37, %cst_10 [1] : vector<8x256xf32> to vector<8xf32>
    %39 = vector.shape_cast %38 : vector<8xf32> to vector<8x1xf32>
    %cst_11 = arith.constant 1.270000e+02 : f32
    %40 = vector.broadcast %cst_11 : f32 to vector<8x1xf32>
    %41 = arith.cmpf ole, %39, %40 : vector<8x1xf32>
    %42 = arith.select %41, %33, %31 : vector<8x1xi1>, vector<8x1xi32>
    %c1_i32 = arith.constant 1 : i32
    %43 = arith.shrsi %c1073741824_i32, %c1_i32 : i32
    %c1_i32_12 = arith.constant 1 : i32
    %44 = vector.broadcast %43 : i32 to vector<8x1xi32>
    %45 = arith.ori %42, %44 : vector<8x1xi32>
    %46 = vector.broadcast %45 : vector<8x1xi32> to vector<8x256xi32>
    %47 = arith.cmpi slt, %20, %46 : vector<8x256xi32>
    %48 = arith.extui %47 : vector<8x256xi1> to vector<8x256xi32>
    %49 = arith.sitofp %48 : vector<8x256xi32> to vector<8x256xf32>
    %cst_13 = arith.constant dense<0.000000e+00> : vector<8xf32>
    %50 = vector.multi_reduction <add>, %49, %cst_13 [1] : vector<8x256xf32> to vector<8xf32>
    %51 = vector.shape_cast %50 : vector<8xf32> to vector<8x1xf32>
    %cst_14 = arith.constant 1.270000e+02 : f32
    %52 = vector.broadcast %cst_14 : f32 to vector<8x1xf32>
    %53 = arith.cmpf ole, %51, %52 : vector<8x1xf32>
    %54 = arith.select %53, %45, %42 : vector<8x1xi1>, vector<8x1xi32>
    %c1_i32_15 = arith.constant 1 : i32
    %55 = arith.shrsi %43, %c1_i32_15 : i32
    %c2_i32 = arith.constant 2 : i32
    %56 = vector.broadcast %55 : i32 to vector<8x1xi32>
    %57 = arith.ori %54, %56 : vector<8x1xi32>
    %58 = vector.broadcast %57 : vector<8x1xi32> to vector<8x256xi32>
    %59 = arith.cmpi slt, %20, %58 : vector<8x256xi32>
    %60 = arith.extui %59 : vector<8x256xi1> to vector<8x256xi32>
    %61 = arith.sitofp %60 : vector<8x256xi32> to vector<8x256xf32>
    %cst_16 = arith.constant dense<0.000000e+00> : vector<8xf32>
    %62 = vector.multi_reduction <add>, %61, %cst_16 [1] : vector<8x256xf32> to vector<8xf32>
    %63 = vector.shape_cast %62 : vector<8xf32> to vector<8x1xf32>
    %cst_17 = arith.constant 1.270000e+02 : f32
    %64 = vector.broadcast %cst_17 : f32 to vector<8x1xf32>
    %65 = arith.cmpf ole, %63, %64 : vector<8x1xf32>
    %66 = arith.select %65, %57, %54 : vector<8x1xi1>, vector<8x1xi32>
    %c1_i32_18 = arith.constant 1 : i32
    %67 = arith.shrsi %55, %c1_i32_18 : i32
    %c3_i32 = arith.constant 3 : i32
    %68 = vector.broadcast %67 : i32 to vector<8x1xi32>
    %69 = arith.ori %66, %68 : vector<8x1xi32>
    %70 = vector.broadcast %69 : vector<8x1xi32> to vector<8x256xi32>
    %71 = arith.cmpi slt, %20, %70 : vector<8x256xi32>
    %72 = arith.extui %71 : vector<8x256xi1> to vector<8x256xi32>
    %73 = arith.sitofp %72 : vector<8x256xi32> to vector<8x256xf32>
    %cst_19 = arith.constant dense<0.000000e+00> : vector<8xf32>
    %74 = vector.multi_reduction <add>, %73, %cst_19 [1] : vector<8x256xf32> to vector<8xf32>
    %75 = vector.shape_cast %74 : vector<8xf32> to vector<8x1xf32>
    %cst_20 = arith.constant 1.270000e+02 : f32
    %76 = vector.broadcast %cst_20 : f32 to vector<8x1xf32>
    %77 = arith.cmpf ole, %75, %76 : vector<8x1xf32>
    %78 = arith.select %77, %69, %66 : vector<8x1xi1>, vector<8x1xi32>
    %c1_i32_21 = arith.constant 1 : i32
    %79 = arith.shrsi %67, %c1_i32_21 : i32
    %c4_i32 = arith.constant 4 : i32
    %80 = vector.broadcast %79 : i32 to vector<8x1xi32>
    %81 = arith.ori %78, %80 : vector<8x1xi32>
    %82 = vector.broadcast %81 : vector<8x1xi32> to vector<8x256xi32>
    %83 = arith.cmpi slt, %20, %82 : vector<8x256xi32>
    %84 = arith.extui %83 : vector<8x256xi1> to vector<8x256xi32>
    %85 = arith.sitofp %84 : vector<8x256xi32> to vector<8x256xf32>
    %cst_22 = arith.constant dense<0.000000e+00> : vector<8xf32>
    %86 = vector.multi_reduction <add>, %85, %cst_22 [1] : vector<8x256xf32> to vector<8xf32>
    %87 = vector.shape_cast %86 : vector<8xf32> to vector<8x1xf32>
    %cst_23 = arith.constant 1.270000e+02 : f32
    %88 = vector.broadcast %cst_23 : f32 to vector<8x1xf32>
    %89 = arith.cmpf ole, %87, %88 : vector<8x1xf32>
    %90 = arith.select %89, %81, %78 : vector<8x1xi1>, vector<8x1xi32>
    %c1_i32_24 = arith.constant 1 : i32
    %91 = arith.shrsi %79, %c1_i32_24 : i32
    %c5_i32 = arith.constant 5 : i32
    %92 = vector.broadcast %91 : i32 to vector<8x1xi32>
    %93 = arith.ori %90, %92 : vector<8x1xi32>
    %94 = vector.broadcast %93 : vector<8x1xi32> to vector<8x256xi32>
    %95 = arith.cmpi slt, %20, %94 : vector<8x256xi32>
    %96 = arith.extui %95 : vector<8x256xi1> to vector<8x256xi32>
    %97 = arith.sitofp %96 : vector<8x256xi32> to vector<8x256xf32>
    %cst_25 = arith.constant dense<0.000000e+00> : vector<8xf32>
    %98 = vector.multi_reduction <add>, %97, %cst_25 [1] : vector<8x256xf32> to vector<8xf32>
    %99 = vector.shape_cast %98 : vector<8xf32> to vector<8x1xf32>
    %cst_26 = arith.constant 1.270000e+02 : f32
    %100 = vector.broadcast %cst_26 : f32 to vector<8x1xf32>
    %101 = arith.cmpf ole, %99, %100 : vector<8x1xf32>
    %102 = arith.select %101, %93, %90 : vector<8x1xi1>, vector<8x1xi32>
    %c1_i32_27 = arith.constant 1 : i32
    %103 = arith.shrsi %91, %c1_i32_27 : i32
    %c6_i32 = arith.constant 6 : i32
    %104 = vector.broadcast %103 : i32 to vector<8x1xi32>
    %105 = arith.ori %102, %104 : vector<8x1xi32>
    %106 = vector.broadcast %105 : vector<8x1xi32> to vector<8x256xi32>
    %107 = arith.cmpi slt, %20, %106 : vector<8x256xi32>
    %108 = arith.extui %107 : vector<8x256xi1> to vector<8x256xi32>
    %109 = arith.sitofp %108 : vector<8x256xi32> to vector<8x256xf32>
    %cst_28 = arith.constant dense<0.000000e+00> : vector<8xf32>
    %110 = vector.multi_reduction <add>, %109, %cst_28 [1] : vector<8x256xf32> to vector<8xf32>
    %111 = vector.shape_cast %110 : vector<8xf32> to vector<8x1xf32>
    %cst_29 = arith.constant 1.270000e+02 : f32
    %112 = vector.broadcast %cst_29 : f32 to vector<8x1xf32>
    %113 = arith.cmpf ole, %111, %112 : vector<8x1xf32>
    %114 = arith.select %113, %105, %102 : vector<8x1xi1>, vector<8x1xi32>
    %c1_i32_30 = arith.constant 1 : i32
    %115 = arith.shrsi %103, %c1_i32_30 : i32
    %c7_i32 = arith.constant 7 : i32
    %116 = vector.broadcast %115 : i32 to vector<8x1xi32>
    %117 = arith.ori %114, %116 : vector<8x1xi32>
    %118 = vector.broadcast %117 : vector<8x1xi32> to vector<8x256xi32>
    %119 = arith.cmpi slt, %20, %118 : vector<8x256xi32>
    %120 = arith.extui %119 : vector<8x256xi1> to vector<8x256xi32>
    %121 = arith.sitofp %120 : vector<8x256xi32> to vector<8x256xf32>
    %cst_31 = arith.constant dense<0.000000e+00> : vector<8xf32>
    %122 = vector.multi_reduction <add>, %121, %cst_31 [1] : vector<8x256xf32> to vector<8xf32>
    %123 = vector.shape_cast %122 : vector<8xf32> to vector<8x1xf32>
    %cst_32 = arith.constant 1.270000e+02 : f32
    %124 = vector.broadcast %cst_32 : f32 to vector<8x1xf32>
    %125 = arith.cmpf ole, %123, %124 : vector<8x1xf32>
    %126 = arith.select %125, %117, %114 : vector<8x1xi1>, vector<8x1xi32>
    %c1_i32_33 = arith.constant 1 : i32
    %127 = arith.shrsi %115, %c1_i32_33 : i32
    %c8_i32 = arith.constant 8 : i32
    %128 = vector.broadcast %127 : i32 to vector<8x1xi32>
    %129 = arith.ori %126, %128 : vector<8x1xi32>
    %130 = vector.broadcast %129 : vector<8x1xi32> to vector<8x256xi32>
    %131 = arith.cmpi slt, %20, %130 : vector<8x256xi32>
    %132 = arith.extui %131 : vector<8x256xi1> to vector<8x256xi32>
    %133 = arith.sitofp %132 : vector<8x256xi32> to vector<8x256xf32>
    %cst_34 = arith.constant dense<0.000000e+00> : vector<8xf32>
    %134 = vector.multi_reduction <add>, %133, %cst_34 [1] : vector<8x256xf32> to vector<8xf32>
    %135 = vector.shape_cast %134 : vector<8xf32> to vector<8x1xf32>
    %cst_35 = arith.constant 1.270000e+02 : f32
    %136 = vector.broadcast %cst_35 : f32 to vector<8x1xf32>
    %137 = arith.cmpf ole, %135, %136 : vector<8x1xf32>
    %138 = arith.select %137, %129, %126 : vector<8x1xi1>, vector<8x1xi32>
    %c1_i32_36 = arith.constant 1 : i32
    %139 = arith.shrsi %127, %c1_i32_36 : i32
    %c9_i32 = arith.constant 9 : i32
    %140 = vector.broadcast %139 : i32 to vector<8x1xi32>
    %141 = arith.ori %138, %140 : vector<8x1xi32>
    %142 = vector.broadcast %141 : vector<8x1xi32> to vector<8x256xi32>
    %143 = arith.cmpi slt, %20, %142 : vector<8x256xi32>
    %144 = arith.extui %143 : vector<8x256xi1> to vector<8x256xi32>
    %145 = arith.sitofp %144 : vector<8x256xi32> to vector<8x256xf32>
    %cst_37 = arith.constant dense<0.000000e+00> : vector<8xf32>
    %146 = vector.multi_reduction <add>, %145, %cst_37 [1] : vector<8x256xf32> to vector<8xf32>
    %147 = vector.shape_cast %146 : vector<8xf32> to vector<8x1xf32>
    %cst_38 = arith.constant 1.270000e+02 : f32
    %148 = vector.broadcast %cst_38 : f32 to vector<8x1xf32>
    %149 = arith.cmpf ole, %147, %148 : vector<8x1xf32>
    %150 = arith.select %149, %141, %138 : vector<8x1xi1>, vector<8x1xi32>
    %c1_i32_39 = arith.constant 1 : i32
    %151 = arith.shrsi %139, %c1_i32_39 : i32
    %c10_i32 = arith.constant 10 : i32
    %152 = vector.broadcast %151 : i32 to vector<8x1xi32>
    %153 = arith.ori %150, %152 : vector<8x1xi32>
    %154 = vector.broadcast %153 : vector<8x1xi32> to vector<8x256xi32>
    %155 = arith.cmpi slt, %20, %154 : vector<8x256xi32>
    %156 = arith.extui %155 : vector<8x256xi1> to vector<8x256xi32>
    %157 = arith.sitofp %156 : vector<8x256xi32> to vector<8x256xf32>
    %cst_40 = arith.constant dense<0.000000e+00> : vector<8xf32>
    %158 = vector.multi_reduction <add>, %157, %cst_40 [1] : vector<8x256xf32> to vector<8xf32>
    %159 = vector.shape_cast %158 : vector<8xf32> to vector<8x1xf32>
    %cst_41 = arith.constant 1.270000e+02 : f32
    %160 = vector.broadcast %cst_41 : f32 to vector<8x1xf32>
    %161 = arith.cmpf ole, %159, %160 : vector<8x1xf32>
    %162 = arith.select %161, %153, %150 : vector<8x1xi1>, vector<8x1xi32>
    %c1_i32_42 = arith.constant 1 : i32
    %163 = arith.shrsi %151, %c1_i32_42 : i32
    %c11_i32 = arith.constant 11 : i32
    %164 = vector.broadcast %163 : i32 to vector<8x1xi32>
    %165 = arith.ori %162, %164 : vector<8x1xi32>
    %166 = vector.broadcast %165 : vector<8x1xi32> to vector<8x256xi32>
    %167 = arith.cmpi slt, %20, %166 : vector<8x256xi32>
    %168 = arith.extui %167 : vector<8x256xi1> to vector<8x256xi32>
    %169 = arith.sitofp %168 : vector<8x256xi32> to vector<8x256xf32>
    %cst_43 = arith.constant dense<0.000000e+00> : vector<8xf32>
    %170 = vector.multi_reduction <add>, %169, %cst_43 [1] : vector<8x256xf32> to vector<8xf32>
    %171 = vector.shape_cast %170 : vector<8xf32> to vector<8x1xf32>
    %cst_44 = arith.constant 1.270000e+02 : f32
    %172 = vector.broadcast %cst_44 : f32 to vector<8x1xf32>
    %173 = arith.cmpf ole, %171, %172 : vector<8x1xf32>
    %174 = arith.select %173, %165, %162 : vector<8x1xi1>, vector<8x1xi32>
    %c1_i32_45 = arith.constant 1 : i32
    %175 = arith.shrsi %163, %c1_i32_45 : i32
    %c12_i32 = arith.constant 12 : i32
    %176 = vector.broadcast %175 : i32 to vector<8x1xi32>
    %177 = arith.ori %174, %176 : vector<8x1xi32>
    %178 = vector.broadcast %177 : vector<8x1xi32> to vector<8x256xi32>
    %179 = arith.cmpi slt, %20, %178 : vector<8x256xi32>
    %180 = arith.extui %179 : vector<8x256xi1> to vector<8x256xi32>
    %181 = arith.sitofp %180 : vector<8x256xi32> to vector<8x256xf32>
    %cst_46 = arith.constant dense<0.000000e+00> : vector<8xf32>
    %182 = vector.multi_reduction <add>, %181, %cst_46 [1] : vector<8x256xf32> to vector<8xf32>
    %183 = vector.shape_cast %182 : vector<8xf32> to vector<8x1xf32>
    %cst_47 = arith.constant 1.270000e+02 : f32
    %184 = vector.broadcast %cst_47 : f32 to vector<8x1xf32>
    %185 = arith.cmpf ole, %183, %184 : vector<8x1xf32>
    %186 = arith.select %185, %177, %174 : vector<8x1xi1>, vector<8x1xi32>
    %c1_i32_48 = arith.constant 1 : i32
    %187 = arith.shrsi %175, %c1_i32_48 : i32
    %c13_i32 = arith.constant 13 : i32
    %188 = vector.broadcast %187 : i32 to vector<8x1xi32>
    %189 = arith.ori %186, %188 : vector<8x1xi32>
    %190 = vector.broadcast %189 : vector<8x1xi32> to vector<8x256xi32>
    %191 = arith.cmpi slt, %20, %190 : vector<8x256xi32>
    %192 = arith.extui %191 : vector<8x256xi1> to vector<8x256xi32>
    %193 = arith.sitofp %192 : vector<8x256xi32> to vector<8x256xf32>
    %cst_49 = arith.constant dense<0.000000e+00> : vector<8xf32>
    %194 = vector.multi_reduction <add>, %193, %cst_49 [1] : vector<8x256xf32> to vector<8xf32>
    %195 = vector.shape_cast %194 : vector<8xf32> to vector<8x1xf32>
    %cst_50 = arith.constant 1.270000e+02 : f32
    %196 = vector.broadcast %cst_50 : f32 to vector<8x1xf32>
    %197 = arith.cmpf ole, %195, %196 : vector<8x1xf32>
    %198 = arith.select %197, %189, %186 : vector<8x1xi1>, vector<8x1xi32>
    %c1_i32_51 = arith.constant 1 : i32
    %199 = arith.shrsi %187, %c1_i32_51 : i32
    %c14_i32 = arith.constant 14 : i32
    %200 = vector.broadcast %199 : i32 to vector<8x1xi32>
    %201 = arith.ori %198, %200 : vector<8x1xi32>
    %202 = vector.broadcast %201 : vector<8x1xi32> to vector<8x256xi32>
    %203 = arith.cmpi slt, %20, %202 : vector<8x256xi32>
    %204 = arith.extui %203 : vector<8x256xi1> to vector<8x256xi32>
    %205 = arith.sitofp %204 : vector<8x256xi32> to vector<8x256xf32>
    %cst_52 = arith.constant dense<0.000000e+00> : vector<8xf32>
    %206 = vector.multi_reduction <add>, %205, %cst_52 [1] : vector<8x256xf32> to vector<8xf32>
    %207 = vector.shape_cast %206 : vector<8xf32> to vector<8x1xf32>
    %cst_53 = arith.constant 1.270000e+02 : f32
    %208 = vector.broadcast %cst_53 : f32 to vector<8x1xf32>
    %209 = arith.cmpf ole, %207, %208 : vector<8x1xf32>
    %210 = arith.select %209, %201, %198 : vector<8x1xi1>, vector<8x1xi32>
    %c1_i32_54 = arith.constant 1 : i32
    %211 = arith.shrsi %199, %c1_i32_54 : i32
    %c15_i32 = arith.constant 15 : i32
    %212 = vector.broadcast %211 : i32 to vector<8x1xi32>
    %213 = arith.ori %210, %212 : vector<8x1xi32>
    %214 = vector.broadcast %213 : vector<8x1xi32> to vector<8x256xi32>
    %215 = arith.cmpi slt, %20, %214 : vector<8x256xi32>
    %216 = arith.extui %215 : vector<8x256xi1> to vector<8x256xi32>
    %217 = arith.sitofp %216 : vector<8x256xi32> to vector<8x256xf32>
    %cst_55 = arith.constant dense<0.000000e+00> : vector<8xf32>
    %218 = vector.multi_reduction <add>, %217, %cst_55 [1] : vector<8x256xf32> to vector<8xf32>
    %219 = vector.shape_cast %218 : vector<8xf32> to vector<8x1xf32>
    %cst_56 = arith.constant 1.270000e+02 : f32
    %220 = vector.broadcast %cst_56 : f32 to vector<8x1xf32>
    %221 = arith.cmpf ole, %219, %220 : vector<8x1xf32>
    %222 = arith.select %221, %213, %210 : vector<8x1xi1>, vector<8x1xi32>
    %c1_i32_57 = arith.constant 1 : i32
    %223 = arith.shrsi %211, %c1_i32_57 : i32
    %c16_i32 = arith.constant 16 : i32
    %224 = vector.broadcast %223 : i32 to vector<8x1xi32>
    %225 = arith.ori %222, %224 : vector<8x1xi32>
    %226 = vector.broadcast %225 : vector<8x1xi32> to vector<8x256xi32>
    %227 = arith.cmpi slt, %20, %226 : vector<8x256xi32>
    %228 = arith.extui %227 : vector<8x256xi1> to vector<8x256xi32>
    %229 = arith.sitofp %228 : vector<8x256xi32> to vector<8x256xf32>
    %cst_58 = arith.constant dense<0.000000e+00> : vector<8xf32>
    %230 = vector.multi_reduction <add>, %229, %cst_58 [1] : vector<8x256xf32> to vector<8xf32>
    %231 = vector.shape_cast %230 : vector<8xf32> to vector<8x1xf32>
    %cst_59 = arith.constant 1.270000e+02 : f32
    %232 = vector.broadcast %cst_59 : f32 to vector<8x1xf32>
    %233 = arith.cmpf ole, %231, %232 : vector<8x1xf32>
    %234 = arith.select %233, %225, %222 : vector<8x1xi1>, vector<8x1xi32>
    %c1_i32_60 = arith.constant 1 : i32
    %235 = arith.shrsi %223, %c1_i32_60 : i32
    %c17_i32 = arith.constant 17 : i32
    %236 = vector.broadcast %235 : i32 to vector<8x1xi32>
    %237 = arith.ori %234, %236 : vector<8x1xi32>
    %238 = vector.broadcast %237 : vector<8x1xi32> to vector<8x256xi32>
    %239 = arith.cmpi slt, %20, %238 : vector<8x256xi32>
    %240 = arith.extui %239 : vector<8x256xi1> to vector<8x256xi32>
    %241 = arith.sitofp %240 : vector<8x256xi32> to vector<8x256xf32>
    %cst_61 = arith.constant dense<0.000000e+00> : vector<8xf32>
    %242 = vector.multi_reduction <add>, %241, %cst_61 [1] : vector<8x256xf32> to vector<8xf32>
    %243 = vector.shape_cast %242 : vector<8xf32> to vector<8x1xf32>
    %cst_62 = arith.constant 1.270000e+02 : f32
    %244 = vector.broadcast %cst_62 : f32 to vector<8x1xf32>
    %245 = arith.cmpf ole, %243, %244 : vector<8x1xf32>
    %246 = arith.select %245, %237, %234 : vector<8x1xi1>, vector<8x1xi32>
    %c1_i32_63 = arith.constant 1 : i32
    %247 = arith.shrsi %235, %c1_i32_63 : i32
    %c18_i32 = arith.constant 18 : i32
    %248 = vector.broadcast %247 : i32 to vector<8x1xi32>
    %249 = arith.ori %246, %248 : vector<8x1xi32>
    %250 = vector.broadcast %249 : vector<8x1xi32> to vector<8x256xi32>
    %251 = arith.cmpi slt, %20, %250 : vector<8x256xi32>
    %252 = arith.extui %251 : vector<8x256xi1> to vector<8x256xi32>
    %253 = arith.sitofp %252 : vector<8x256xi32> to vector<8x256xf32>
    %cst_64 = arith.constant dense<0.000000e+00> : vector<8xf32>
    %254 = vector.multi_reduction <add>, %253, %cst_64 [1] : vector<8x256xf32> to vector<8xf32>
    %255 = vector.shape_cast %254 : vector<8xf32> to vector<8x1xf32>
    %cst_65 = arith.constant 1.270000e+02 : f32
    %256 = vector.broadcast %cst_65 : f32 to vector<8x1xf32>
    %257 = arith.cmpf ole, %255, %256 : vector<8x1xf32>
    %258 = arith.select %257, %249, %246 : vector<8x1xi1>, vector<8x1xi32>
    %c1_i32_66 = arith.constant 1 : i32
    %259 = arith.shrsi %247, %c1_i32_66 : i32
    %c19_i32 = arith.constant 19 : i32
    %260 = vector.broadcast %259 : i32 to vector<8x1xi32>
    %261 = arith.ori %258, %260 : vector<8x1xi32>
    %262 = vector.broadcast %261 : vector<8x1xi32> to vector<8x256xi32>
    %263 = arith.cmpi slt, %20, %262 : vector<8x256xi32>
    %264 = arith.extui %263 : vector<8x256xi1> to vector<8x256xi32>
    %265 = arith.sitofp %264 : vector<8x256xi32> to vector<8x256xf32>
    %cst_67 = arith.constant dense<0.000000e+00> : vector<8xf32>
    %266 = vector.multi_reduction <add>, %265, %cst_67 [1] : vector<8x256xf32> to vector<8xf32>
    %267 = vector.shape_cast %266 : vector<8xf32> to vector<8x1xf32>
    %cst_68 = arith.constant 1.270000e+02 : f32
    %268 = vector.broadcast %cst_68 : f32 to vector<8x1xf32>
    %269 = arith.cmpf ole, %267, %268 : vector<8x1xf32>
    %270 = arith.select %269, %261, %258 : vector<8x1xi1>, vector<8x1xi32>
    %c1_i32_69 = arith.constant 1 : i32
    %271 = arith.shrsi %259, %c1_i32_69 : i32
    %c20_i32 = arith.constant 20 : i32
    %272 = vector.broadcast %271 : i32 to vector<8x1xi32>
    %273 = arith.ori %270, %272 : vector<8x1xi32>
    %274 = vector.broadcast %273 : vector<8x1xi32> to vector<8x256xi32>
    %275 = arith.cmpi slt, %20, %274 : vector<8x256xi32>
    %276 = arith.extui %275 : vector<8x256xi1> to vector<8x256xi32>
    %277 = arith.sitofp %276 : vector<8x256xi32> to vector<8x256xf32>
    %cst_70 = arith.constant dense<0.000000e+00> : vector<8xf32>
    %278 = vector.multi_reduction <add>, %277, %cst_70 [1] : vector<8x256xf32> to vector<8xf32>
    %279 = vector.shape_cast %278 : vector<8xf32> to vector<8x1xf32>
    %cst_71 = arith.constant 1.270000e+02 : f32
    %280 = vector.broadcast %cst_71 : f32 to vector<8x1xf32>
    %281 = arith.cmpf ole, %279, %280 : vector<8x1xf32>
    %282 = arith.select %281, %273, %270 : vector<8x1xi1>, vector<8x1xi32>
    %c1_i32_72 = arith.constant 1 : i32
    %283 = arith.shrsi %271, %c1_i32_72 : i32
    %c21_i32 = arith.constant 21 : i32
    %284 = vector.broadcast %283 : i32 to vector<8x1xi32>
    %285 = arith.ori %282, %284 : vector<8x1xi32>
    %286 = vector.broadcast %285 : vector<8x1xi32> to vector<8x256xi32>
    %287 = arith.cmpi slt, %20, %286 : vector<8x256xi32>
    %288 = arith.extui %287 : vector<8x256xi1> to vector<8x256xi32>
    %289 = arith.sitofp %288 : vector<8x256xi32> to vector<8x256xf32>
    %cst_73 = arith.constant dense<0.000000e+00> : vector<8xf32>
    %290 = vector.multi_reduction <add>, %289, %cst_73 [1] : vector<8x256xf32> to vector<8xf32>
    %291 = vector.shape_cast %290 : vector<8xf32> to vector<8x1xf32>
    %cst_74 = arith.constant 1.270000e+02 : f32
    %292 = vector.broadcast %cst_74 : f32 to vector<8x1xf32>
    %293 = arith.cmpf ole, %291, %292 : vector<8x1xf32>
    %294 = arith.select %293, %285, %282 : vector<8x1xi1>, vector<8x1xi32>
    %c1_i32_75 = arith.constant 1 : i32
    %295 = arith.shrsi %283, %c1_i32_75 : i32
    %c22_i32 = arith.constant 22 : i32
    %296 = vector.broadcast %295 : i32 to vector<8x1xi32>
    %297 = arith.ori %294, %296 : vector<8x1xi32>
    %298 = vector.broadcast %297 : vector<8x1xi32> to vector<8x256xi32>
    %299 = arith.cmpi slt, %20, %298 : vector<8x256xi32>
    %300 = arith.extui %299 : vector<8x256xi1> to vector<8x256xi32>
    %301 = arith.sitofp %300 : vector<8x256xi32> to vector<8x256xf32>
    %cst_76 = arith.constant dense<0.000000e+00> : vector<8xf32>
    %302 = vector.multi_reduction <add>, %301, %cst_76 [1] : vector<8x256xf32> to vector<8xf32>
    %303 = vector.shape_cast %302 : vector<8xf32> to vector<8x1xf32>
    %cst_77 = arith.constant 1.270000e+02 : f32
    %304 = vector.broadcast %cst_77 : f32 to vector<8x1xf32>
    %305 = arith.cmpf ole, %303, %304 : vector<8x1xf32>
    %306 = arith.select %305, %297, %294 : vector<8x1xi1>, vector<8x1xi32>
    %c1_i32_78 = arith.constant 1 : i32
    %307 = arith.shrsi %295, %c1_i32_78 : i32
    %c23_i32 = arith.constant 23 : i32
    %308 = vector.broadcast %307 : i32 to vector<8x1xi32>
    %309 = arith.ori %306, %308 : vector<8x1xi32>
    %310 = vector.broadcast %309 : vector<8x1xi32> to vector<8x256xi32>
    %311 = arith.cmpi slt, %20, %310 : vector<8x256xi32>
    %312 = arith.extui %311 : vector<8x256xi1> to vector<8x256xi32>
    %313 = arith.sitofp %312 : vector<8x256xi32> to vector<8x256xf32>
    %cst_79 = arith.constant dense<0.000000e+00> : vector<8xf32>
    %314 = vector.multi_reduction <add>, %313, %cst_79 [1] : vector<8x256xf32> to vector<8xf32>
    %315 = vector.shape_cast %314 : vector<8xf32> to vector<8x1xf32>
    %cst_80 = arith.constant 1.270000e+02 : f32
    %316 = vector.broadcast %cst_80 : f32 to vector<8x1xf32>
    %317 = arith.cmpf ole, %315, %316 : vector<8x1xf32>
    %318 = arith.select %317, %309, %306 : vector<8x1xi1>, vector<8x1xi32>
    %c1_i32_81 = arith.constant 1 : i32
    %319 = arith.shrsi %307, %c1_i32_81 : i32
    %c24_i32 = arith.constant 24 : i32
    %320 = vector.broadcast %319 : i32 to vector<8x1xi32>
    %321 = arith.ori %318, %320 : vector<8x1xi32>
    %322 = vector.broadcast %321 : vector<8x1xi32> to vector<8x256xi32>
    %323 = arith.cmpi slt, %20, %322 : vector<8x256xi32>
    %324 = arith.extui %323 : vector<8x256xi1> to vector<8x256xi32>
    %325 = arith.sitofp %324 : vector<8x256xi32> to vector<8x256xf32>
    %cst_82 = arith.constant dense<0.000000e+00> : vector<8xf32>
    %326 = vector.multi_reduction <add>, %325, %cst_82 [1] : vector<8x256xf32> to vector<8xf32>
    %327 = vector.shape_cast %326 : vector<8xf32> to vector<8x1xf32>
    %cst_83 = arith.constant 1.270000e+02 : f32
    %328 = vector.broadcast %cst_83 : f32 to vector<8x1xf32>
    %329 = arith.cmpf ole, %327, %328 : vector<8x1xf32>
    %330 = arith.select %329, %321, %318 : vector<8x1xi1>, vector<8x1xi32>
    %c1_i32_84 = arith.constant 1 : i32
    %331 = arith.shrsi %319, %c1_i32_84 : i32
    %c25_i32 = arith.constant 25 : i32
    %332 = vector.broadcast %331 : i32 to vector<8x1xi32>
    %333 = arith.ori %330, %332 : vector<8x1xi32>
    %334 = vector.broadcast %333 : vector<8x1xi32> to vector<8x256xi32>
    %335 = arith.cmpi slt, %20, %334 : vector<8x256xi32>
    %336 = arith.extui %335 : vector<8x256xi1> to vector<8x256xi32>
    %337 = arith.sitofp %336 : vector<8x256xi32> to vector<8x256xf32>
    %cst_85 = arith.constant dense<0.000000e+00> : vector<8xf32>
    %338 = vector.multi_reduction <add>, %337, %cst_85 [1] : vector<8x256xf32> to vector<8xf32>
    %339 = vector.shape_cast %338 : vector<8xf32> to vector<8x1xf32>
    %cst_86 = arith.constant 1.270000e+02 : f32
    %340 = vector.broadcast %cst_86 : f32 to vector<8x1xf32>
    %341 = arith.cmpf ole, %339, %340 : vector<8x1xf32>
    %342 = arith.select %341, %333, %330 : vector<8x1xi1>, vector<8x1xi32>
    %c1_i32_87 = arith.constant 1 : i32
    %343 = arith.shrsi %331, %c1_i32_87 : i32
    %c26_i32 = arith.constant 26 : i32
    %344 = vector.broadcast %343 : i32 to vector<8x1xi32>
    %345 = arith.ori %342, %344 : vector<8x1xi32>
    %346 = vector.broadcast %345 : vector<8x1xi32> to vector<8x256xi32>
    %347 = arith.cmpi slt, %20, %346 : vector<8x256xi32>
    %348 = arith.extui %347 : vector<8x256xi1> to vector<8x256xi32>
    %349 = arith.sitofp %348 : vector<8x256xi32> to vector<8x256xf32>
    %cst_88 = arith.constant dense<0.000000e+00> : vector<8xf32>
    %350 = vector.multi_reduction <add>, %349, %cst_88 [1] : vector<8x256xf32> to vector<8xf32>
    %351 = vector.shape_cast %350 : vector<8xf32> to vector<8x1xf32>
    %cst_89 = arith.constant 1.270000e+02 : f32
    %352 = vector.broadcast %cst_89 : f32 to vector<8x1xf32>
    %353 = arith.cmpf ole, %351, %352 : vector<8x1xf32>
    %354 = arith.select %353, %345, %342 : vector<8x1xi1>, vector<8x1xi32>
    %c1_i32_90 = arith.constant 1 : i32
    %355 = arith.shrsi %343, %c1_i32_90 : i32
    %c27_i32 = arith.constant 27 : i32
    %356 = vector.broadcast %355 : i32 to vector<8x1xi32>
    %357 = arith.ori %354, %356 : vector<8x1xi32>
    %358 = vector.broadcast %357 : vector<8x1xi32> to vector<8x256xi32>
    %359 = arith.cmpi slt, %20, %358 : vector<8x256xi32>
    %360 = arith.extui %359 : vector<8x256xi1> to vector<8x256xi32>
    %361 = arith.sitofp %360 : vector<8x256xi32> to vector<8x256xf32>
    %cst_91 = arith.constant dense<0.000000e+00> : vector<8xf32>
    %362 = vector.multi_reduction <add>, %361, %cst_91 [1] : vector<8x256xf32> to vector<8xf32>
    %363 = vector.shape_cast %362 : vector<8xf32> to vector<8x1xf32>
    %cst_92 = arith.constant 1.270000e+02 : f32
    %364 = vector.broadcast %cst_92 : f32 to vector<8x1xf32>
    %365 = arith.cmpf ole, %363, %364 : vector<8x1xf32>
    %366 = arith.select %365, %357, %354 : vector<8x1xi1>, vector<8x1xi32>
    %c1_i32_93 = arith.constant 1 : i32
    %367 = arith.shrsi %355, %c1_i32_93 : i32
    %c28_i32 = arith.constant 28 : i32
    %368 = vector.broadcast %367 : i32 to vector<8x1xi32>
    %369 = arith.ori %366, %368 : vector<8x1xi32>
    %370 = vector.broadcast %369 : vector<8x1xi32> to vector<8x256xi32>
    %371 = arith.cmpi slt, %20, %370 : vector<8x256xi32>
    %372 = arith.extui %371 : vector<8x256xi1> to vector<8x256xi32>
    %373 = arith.sitofp %372 : vector<8x256xi32> to vector<8x256xf32>
    %cst_94 = arith.constant dense<0.000000e+00> : vector<8xf32>
    %374 = vector.multi_reduction <add>, %373, %cst_94 [1] : vector<8x256xf32> to vector<8xf32>
    %375 = vector.shape_cast %374 : vector<8xf32> to vector<8x1xf32>
    %cst_95 = arith.constant 1.270000e+02 : f32
    %376 = vector.broadcast %cst_95 : f32 to vector<8x1xf32>
    %377 = arith.cmpf ole, %375, %376 : vector<8x1xf32>
    %378 = arith.select %377, %369, %366 : vector<8x1xi1>, vector<8x1xi32>
    %c1_i32_96 = arith.constant 1 : i32
    %379 = arith.shrsi %367, %c1_i32_96 : i32
    %c29_i32 = arith.constant 29 : i32
    %380 = vector.broadcast %379 : i32 to vector<8x1xi32>
    %381 = arith.ori %378, %380 : vector<8x1xi32>
    %382 = vector.broadcast %381 : vector<8x1xi32> to vector<8x256xi32>
    %383 = arith.cmpi slt, %20, %382 : vector<8x256xi32>
    %384 = arith.extui %383 : vector<8x256xi1> to vector<8x256xi32>
    %385 = arith.sitofp %384 : vector<8x256xi32> to vector<8x256xf32>
    %cst_97 = arith.constant dense<0.000000e+00> : vector<8xf32>
    %386 = vector.multi_reduction <add>, %385, %cst_97 [1] : vector<8x256xf32> to vector<8xf32>
    %387 = vector.shape_cast %386 : vector<8xf32> to vector<8x1xf32>
    %cst_98 = arith.constant 1.270000e+02 : f32
    %388 = vector.broadcast %cst_98 : f32 to vector<8x1xf32>
    %389 = arith.cmpf ole, %387, %388 : vector<8x1xf32>
    %390 = arith.select %389, %381, %378 : vector<8x1xi1>, vector<8x1xi32>
    %c1_i32_99 = arith.constant 1 : i32
    %391 = arith.shrsi %379, %c1_i32_99 : i32
    %c30_i32 = arith.constant 30 : i32
    %392 = vector.broadcast %391 : i32 to vector<8x1xi32>
    %393 = arith.ori %390, %392 : vector<8x1xi32>
    %394 = vector.broadcast %393 : vector<8x1xi32> to vector<8x256xi32>
    %395 = arith.cmpi slt, %20, %394 : vector<8x256xi32>
    %396 = arith.extui %395 : vector<8x256xi1> to vector<8x256xi32>
    %397 = arith.sitofp %396 : vector<8x256xi32> to vector<8x256xf32>
    %cst_100 = arith.constant dense<0.000000e+00> : vector<8xf32>
    %398 = vector.multi_reduction <add>, %397, %cst_100 [1] : vector<8x256xf32> to vector<8xf32>
    %399 = vector.shape_cast %398 : vector<8xf32> to vector<8x1xf32>
    %cst_101 = arith.constant 1.270000e+02 : f32
    %400 = vector.broadcast %cst_101 : f32 to vector<8x1xf32>
    %401 = arith.cmpf ole, %399, %400 : vector<8x1xf32>
    %402 = arith.select %401, %393, %390 : vector<8x1xi1>, vector<8x1xi32>
    %c1_i32_102 = arith.constant 1 : i32
    %403 = arith.shrsi %391, %c1_i32_102 : i32
    %c0_i32_103 = arith.constant 0 : i32
    %404 = vector.broadcast %c0_i32_103 : i32 to vector<8x1xi32>
    %405 = arith.cmpi slt, %402, %404 : vector<8x1xi32>
    %c2147483647_i32_104 = arith.constant 2147483647 : i32
    %406 = vector.broadcast %c2147483647_i32_104 : i32 to vector<8x1xi32>
    %407 = arith.xori %402, %406 : vector<8x1xi32>
    %408 = arith.select %405, %407, %402 : vector<8x1xi1>, vector<8x1xi32>
    %409 = tpu.bitcast %408 : vector<8x1xi32> -> vector<8x1xf32>
    %c0_105 = arith.constant 0 : index
    %c0_106 = arith.constant 0 : index
    %410 = vector.load %arg2[%c0_105, %c0_106] : memref<8x4xf32, #tpu.memory_space<vmem>>, vector<8x4xf32>
    %411 = vector.extract_strided_slice %410 {offsets = [0, 0], sizes = [8, 1], strides = [1, 1]} : vector<8x4xf32> to vector<8x1xf32>
    %412 = arith.mulf %411, %4 : vector<8x1xf32>
    %413 = vector.extract_strided_slice %410 {offsets = [0, 1], sizes = [8, 1], strides = [1, 1]} : vector<8x4xf32> to vector<8x1xf32>
    %414 = arith.mulf %413, %14 : vector<8x1xf32>
    %415 = arith.addf %412, %414 : vector<8x1xf32>
    %416 = vector.extract_strided_slice %410 {offsets = [0, 2], sizes = [8, 1], strides = [1, 1]} : vector<8x4xf32> to vector<8x1xf32>
    %417 = arith.mulf %416, %409 : vector<8x1xf32>
    %418 = arith.addf %415, %417 : vector<8x1xf32>
    %419 = vector.extract_strided_slice %410 {offsets = [0, 3], sizes = [8, 1], strides = [1, 1]} : vector<8x4xf32> to vector<8x1xf32>
    %420 = arith.addf %418, %419 : vector<8x1xf32>
    %cst_107 = arith.constant 0.000000e+00 : f32
    %421 = vector.broadcast %cst_107 : f32 to vector<8x1xf32>
    %422 = arith.subf %421, %420 : vector<8x1xf32>
    %423 = math.exp %422 : vector<8x1xf32>
    %cst_108 = arith.constant 1.000000e+00 : f32
    %424 = vector.broadcast %cst_108 : f32 to vector<8x1xf32>
    %425 = arith.addf %424, %423 : vector<8x1xf32>
    %cst_109 = arith.constant 1.000000e+00 : f32
    %426 = vector.broadcast %cst_109 : f32 to vector<8x1xf32>
    %427 = arith.divf %426, %425 : vector<8x1xf32>
    %c0_110 = arith.constant 0 : index
    %c0_111 = arith.constant 0 : index
    %428 = vector.load %arg1[%c0_110, %c0_111] : memref<8x256xf32, #tpu.memory_space<vmem>>, vector<8x256xf32>
    %429 = vector.broadcast %427 : vector<8x1xf32> to vector<8x256xf32>
    %430 = arith.mulf %428, %429 : vector<8x256xf32>
    %c0_112 = arith.constant 0 : index
    %c0_113 = arith.constant 0 : index
    %431 = vector.load %arg3[%c0_112, %c0_113] : memref<8x256xf32, #tpu.memory_space<vmem>>, vector<8x256xf32>
    tpu.vector_store %arg3[%c0_112, %c0_113], %430 {strides = array<i32>} : memref<8x256xf32, #tpu.memory_space<vmem>>, vector<8x256xf32>,
    return
  }
  func.func @transform_0(%arg0: i32) -> (i32, i32) {
    %c0_i32 = arith.constant 0 : i32
    %c0_i32_0 = arith.constant 0 : i32
    return %arg0, %c0_i32 : i32, i32
  }
  func.func @transform_1(%arg0: i32) -> (i32, i32) {
    %c0_i32 = arith.constant 0 : i32
    %c0_i32_0 = arith.constant 0 : i32
    return %arg0, %c0_i32 : i32, i32
  }
  func.func @transform_2(%arg0: i32) -> (i32, i32) {
    %c0_i32 = arith.constant 0 : i32
    %c0_i32_0 = arith.constant 0 : i32
    return %arg0, %c0_i32 : i32, i32
  }
}

</mosaic_0001>

<llo_original>
// kernel: tpu_custom_call.1
$region0: #{tpu_custom_call.1}
  #allocation0 [shape = 'u32[]', space=smem, size = 0x4, offset = 0x4, fixed_abs, tag = 'smem constant byte address 0x4 - core index']
  #allocation1 [shape = 'u32[144,128]{1,0:T(1,128)}', space=vmem, size = 0x12000, scoped, tag = 'internal scratch']
  %s0 = inlined_call_operand.hbm [shape: f32[8,256], index: 0, kind: input, shape index: {}]
  %s1 = inlined_call_operand.vmem [shape: f32[8,4], index: 1, kind: input, shape index: {}]
  %s2 = inlined_call_operand.hbm [shape: f32[8,256], index: 2, kind: output, shape index: {}]
  %s3 = sld [smem:[#allocation0]]
  $region22: #{tpu_custom_call.1} parent=0
    _
  %s5 = ssub.s32 1, %s3
  %s6 = scalar_select 0, %s5, %s3
  $region1: #{tpu_custom_call.1} parent=0
    #allocation2 [shape = 'u8[8192]{0}', space=vmem, size = 0x2000, scoped, tag = 'input window, operand 0, single buffered']
    #allocation3 [shape = 's32[1]{0}', space=sflag, size = 0x4, scoped, tag = 'scoped memory for tpu_custom_call.1']
    #allocation4 [shape = 's32[1]{0}', space=sflag, size = 0x4, scoped, tag = 'scoped memory for tpu_custom_call.1']
    #allocation5 [shape = 'u8[8192]{0}', space=vmem, size = 0x2000, scoped, tag = 'output window, operand 0, single buffered']
    %7 = vsyncpa [#allocation3], 0
    %8 = vsyncpa [#allocation4], 0
    // Predicated region
    $region2: #{tpu_custom_call.1} parent=1 // pred_check
      _
    $region3: #{tpu_custom_call.1} parent=1 // pred_check_branch
      %10 = sbr.rel (0) target = $region5
    $region4: #{tpu_custom_call.1} parent=1 // pred_region
      %s12 = ssub.s32 256, 256
      %13 = vsyncadd [#allocation3], %s12
      %s15 = sshll.u32 [#allocation2], 4
      %s16 = int_to_ptr.vmem [resolvable:$true] %s15
      %18 = dma.hbm_to_vmem [thread:$0]  %s0, 256, %s16, [#allocation3]
    $region5: #{tpu_custom_call.1} parent=1 // pred_fallthru
      _
    // Predicated region
    $region6: #{tpu_custom_call.1} parent=1 // pred_check
      _
    $region7: #{tpu_custom_call.1} parent=1 // pred_check_branch
      %20 = sbr.rel (0) target = $region9
    $region8: #{tpu_custom_call.1} parent=1 // pred_region
      _
    $region9: #{tpu_custom_call.1} parent=1 // pred_fallthru
      _
    // Predicated region
    $region10: #{tpu_custom_call.1} parent=1 // pred_check
      _
    $region11: #{tpu_custom_call.1} parent=1 // pred_check_branch
      %22 = sbr.rel (0) target = $region13
    $region12: #{tpu_custom_call.1} parent=1 // pred_region
      %23 = dma.done [#allocation3], 256
    $region13: #{tpu_custom_call.1} parent=1 // pred_fallthru
      _
    %v24 = vld [vmem:[#allocation2] sm:$0xff]
    %v25 = vld [vmem:[#allocation2 + $0x8] sm:$0xff]
    %v26 = vadd.f32 %v24, %v25
    %27 = vadd.xlane.f32.xlu0 %v26
    %v28 = vpop.xlane.xlu0 %27
    %v29 = vmul.f32 %v28, 0.00390625
    %v30 = vsub.f32 %v24, %v29
    %v31 = vsub.f32 %v25, %v29
    %v32 = vmul.f32 %v30, %v30
    %v33 = vmul.f32 %v31, %v31
    %v34 = vadd.f32 %v32, %v33
    %35 = vadd.xlane.f32.xlu0 %v34
    %v36 = vpop.xlane.xlu0 %35
    %v37 = vmul.f32 %v36, 0.003921569
    %v38 = vmax.f32 %v37, 0.0
    %v39 = vrsqrt.pop %v38
    %v40 = vmul.f32 %v38, %v39
    %vm41 = vcmp.eq.f32.partialorder %v38, inf
    %v42 = vsel %vm41, %v38, %v40
    %vm43 = vcmp.eq.f32.partialorder %v38, 0.0
    %v44 = vand.u32 %v38, 2147483648
    %v45 = vsel %vm43, %v44, %v42
    %vm48 = vcmp.lt.s32.totalorder %v24, 0
    %vm49 = vcmp.lt.s32.totalorder %v25, 0
    %v50 = vxor.u32 %v24, 2147483647
    %v51 = vxor.u32 %v25, 2147483647
    %v52 = vsel %vm48, %v50, %v24
    %v53 = vsel %vm49, %v51, %v25
    %vm54 = vcmp.lt.s32.totalorder %v52, 0
    %vm55 = vcmp.lt.s32.totalorder %v53, 0
    %v56 = vsel %vm54, 1, 0
    %v57 = vsel %vm55, 1, 0
    %v58 = vcvt.s32.f32 %v56
    %v59 = vcvt.s32.f32 %v57
    %v60 = vadd.f32 %v58, %v59
    %61 = vadd.xlane.f32.xlu0 %v60
    %v62 = vpop.xlane.xlu0 %61
    %vm63 = vcmp.gt.f32.partialorder %v62, 127.0
    %v64 = vsel %vm63, 2147483648, 0
    %v65 = vor.u32 %v64, 1073741824
    %vm66 = vcmp.lt.s32.totalorder %v52, %v65
    %vm67 = vcmp.lt.s32.totalorder %v53, %v65
    %v68 = vsel %vm66, 1, 0
    %v69 = vsel %vm67, 1, 0
    %v70 = vcvt.s32.f32 %v68
    %v71 = vcvt.s32.f32 %v69
    %v72 = vadd.f32 %v70, %v71
    %73 = vadd.xlane.f32.xlu0 %v72
    %v74 = vpop.xlane.xlu0 %73
    %vm75 = vcmp.le.f32.partialorder %v74, 127.0
    %v76 = vsel %vm75, %v65, %v64
    %v77 = vor.u32 %v76, 536870912
    %vm78 = vcmp.lt.s32.totalorder %v52, %v77
    %vm79 = vcmp.lt.s32.totalorder %v53, %v77
    %v80 = vsel %vm78, 1, 0
    %v81 = vsel %vm79, 1, 0
    %v82 = vcvt.s32.f32 %v80
    %v83 = vcvt.s32.f32 %v81
    %v84 = vadd.f32 %v82, %v83
    %85 = vadd.xlane.f32.xlu0 %v84
    %v86 = vpop.xlane.xlu0 %85
    %vm87 = vcmp.le.f32.partialorder %v86, 127.0
    %v88 = vsel %vm87, %v77, %v76
    %v89 = vor.u32 %v88, 268435456
    %vm90 = vcmp.lt.s32.totalorder %v52, %v89
    %vm91 = vcmp.lt.s32.totalorder %v53, %v89
    %v92 = vsel %vm90, 1, 0
    %v93 = vsel %vm91, 1, 0
    %v94 = vcvt.s32.f32 %v92
    %v95 = vcvt.s32.f32 %v93
    %v96 = vadd.f32 %v94, %v95
    %97 = vadd.xlane.f32.xlu0 %v96
    %v98 = vpop.xlane.xlu0 %97
    %vm99 = vcmp.le.f32.partialorder %v98, 127.0
    %v100 = vsel %vm99, %v89, %v88
    %v101 = vor.u32 %v100, 134217728
    %vm102 = vcmp.lt.s32.totalorder %v52, %v101
    %vm103 = vcmp.lt.s32.totalorder %v53, %v101
    %v104 = vsel %vm102, 1, 0
    %v105 = vsel %vm103, 1, 0
    %v106 = vcvt.s32.f32 %v104
    %v107 = vcvt.s32.f32 %v105
    %v108 = vadd.f32 %v106, %v107
    %109 = vadd.xlane.f32.xlu0 %v108
    %v110 = vpop.xlane.xlu0 %109
    %vm111 = vcmp.le.f32.partialorder %v110, 127.0
    %v112 = vsel %vm111, %v101, %v100
    %v113 = vor.u32 %v112, 67108864
    %vm114 = vcmp.lt.s32.totalorder %v52, %v113
    %vm115 = vcmp.lt.s32.totalorder %v53, %v113
    %v116 = vsel %vm114, 1, 0
    %v117 = vsel %vm115, 1, 0
    %v118 = vcvt.s32.f32 %v116
    %v119 = vcvt.s32.f32 %v117
    %v120 = vadd.f32 %v118, %v119
    %121 = vadd.xlane.f32.xlu0 %v120
    %v122 = vpop.xlane.xlu0 %121
    %vm123 = vcmp.le.f32.partialorder %v122, 127.0
    %v124 = vsel %vm123, %v113, %v112
    %v125 = vor.u32 %v124, 33554432
    %vm126 = vcmp.lt.s32.totalorder %v52, %v125
    %vm127 = vcmp.lt.s32.totalorder %v53, %v125
    %v128 = vsel %vm126, 1, 0
    %v129 = vsel %vm127, 1, 0
    %v130 = vcvt.s32.f32 %v128
    %v131 = vcvt.s32.f32 %v129
    %v132 = vadd.f32 %v130, %v131
    %133 = vadd.xlane.f32.xlu0 %v132
    %v134 = vpop.xlane.xlu0 %133
    %vm135 = vcmp.le.f32.partialorder %v134, 127.0
    %v136 = vsel %vm135, %v125, %v124
    %v137 = vor.u32 %v136, 16777216
    %vm138 = vcmp.lt.s32.totalorder %v52, %v137
    %vm139 = vcmp.lt.s32.totalorder %v53, %v137
    %v140 = vsel %vm138, 1, 0
    %v141 = vsel %vm139, 1, 0
    %v142 = vcvt.s32.f32 %v140
    %v143 = vcvt.s32.f32 %v141
    %v144 = vadd.f32 %v142, %v143
    %145 = vadd.xlane.f32.xlu0 %v144
    %v146 = vpop.xlane.xlu0 %145
    %vm147 = vcmp.le.f32.partialorder %v146, 127.0
    %v148 = vsel %vm147, %v137, %v136
    %v149 = vor.u32 %v148, 8388608
    %vm150 = vcmp.lt.s32.totalorder %v52, %v149
    %vm151 = vcmp.lt.s32.totalorder %v53, %v149
    %v152 = vsel %vm150, 1, 0
    %v153 = vsel %vm151, 1, 0
    %v154 = vcvt.s32.f32 %v152
    %v155 = vcvt.s32.f32 %v153
    %v156 = vadd.f32 %v154, %v155
    %157 = vadd.xlane.f32.xlu0 %v156
    %v158 = vpop.xlane.xlu0 %157
    %vm159 = vcmp.le.f32.partialorder %v158, 127.0
    %v160 = vsel %vm159, %v149, %v148
    %v161 = vor.u32 %v160, 4194304
    %vm162 = vcmp.lt.s32.totalorder %v52, %v161
    %vm163 = vcmp.lt.s32.totalorder %v53, %v161
    %v164 = vsel %vm162, 1, 0
    %v165 = vsel %vm163, 1, 0
    %v166 = vcvt.s32.f32 %v164
    %v167 = vcvt.s32.f32 %v165
    %v168 = vadd.f32 %v166, %v167
    %169 = vadd.xlane.f32.xlu0 %v168
    %v170 = vpop.xlane.xlu0 %169
    %vm171 = vcmp.le.f32.partialorder %v170, 127.0
    %v172 = vsel %vm171, %v161, %v160
    %v173 = vor.u32 %v172, 2097152
    %vm174 = vcmp.lt.s32.totalorder %v52, %v173
    %vm175 = vcmp.lt.s32.totalorder %v53, %v173
    %v176 = vsel %vm174, 1, 0
    %v177 = vsel %vm175, 1, 0
    %v178 = vcvt.s32.f32 %v176
    %v179 = vcvt.s32.f32 %v177
    %v180 = vadd.f32 %v178, %v179
    %181 = vadd.xlane.f32.xlu0 %v180
    %v182 = vpop.xlane.xlu0 %181
    %vm183 = vcmp.le.f32.partialorder %v182, 127.0
    %v184 = vsel %vm183, %v173, %v172
    %v185 = vor.u32 %v184, 1048576
    %vm186 = vcmp.lt.s32.totalorder %v52, %v185
    %vm187 = vcmp.lt.s32.totalorder %v53, %v185
    %v188 = vsel %vm186, 1, 0
    %v189 = vsel %vm187, 1, 0
    %v190 = vcvt.s32.f32 %v188
    %v191 = vcvt.s32.f32 %v189
    %v192 = vadd.f32 %v190, %v191
    %193 = vadd.xlane.f32.xlu0 %v192
    %v194 = vpop.xlane.xlu0 %193
    %vm195 = vcmp.le.f32.partialorder %v194, 127.0
    %v196 = vsel %vm195, %v185, %v184
    %v197 = vor.u32 %v196, 524288
    %vm198 = vcmp.lt.s32.totalorder %v52, %v197
    %vm199 = vcmp.lt.s32.totalorder %v53, %v197
    %v200 = vsel %vm198, 1, 0
    %v201 = vsel %vm199, 1, 0
    %v202 = vcvt.s32.f32 %v200
    %v203 = vcvt.s32.f32 %v201
    %v204 = vadd.f32 %v202, %v203
    %205 = vadd.xlane.f32.xlu0 %v204
    %v206 = vpop.xlane.xlu0 %205
    %vm207 = vcmp.le.f32.partialorder %v206, 127.0
    %v208 = vsel %vm207, %v197, %v196
    %v209 = vor.u32 %v208, 262144
    %vm210 = vcmp.lt.s32.totalorder %v52, %v209
    %vm211 = vcmp.lt.s32.totalorder %v53, %v209
    %v212 = vsel %vm210, 1, 0
    %v213 = vsel %vm211, 1, 0
    %v214 = vcvt.s32.f32 %v212
    %v215 = vcvt.s32.f32 %v213
    %v216 = vadd.f32 %v214, %v215
    %217 = vadd.xlane.f32.xlu0 %v216
    %v218 = vpop.xlane.xlu0 %217
    %vm219 = vcmp.le.f32.partialorder %v218, 127.0
    %v220 = vsel %vm219, %v209, %v208
    %v221 = vor.u32 %v220, 131072
    %vm222 = vcmp.lt.s32.totalorder %v52, %v221
    %vm223 = vcmp.lt.s32.totalorder %v53, %v221
    %v224 = vsel %vm222, 1, 0
    %v225 = vsel %vm223, 1, 0
    %v226 = vcvt.s32.f32 %v224
    %v227 = vcvt.s32.f32 %v225
    %v228 = vadd.f32 %v226, %v227
    %229 = vadd.xlane.f32.xlu0 %v228
    %v230 = vpop.xlane.xlu0 %229
    %vm231 = vcmp.le.f32.partialorder %v230, 127.0
    %v232 = vsel %vm231, %v221, %v220
    %v233 = vor.u32 %v232, 65536
    %vm234 = vcmp.lt.s32.totalorder %v52, %v233
    %vm235 = vcmp.lt.s32.totalorder %v53, %v233
    %v236 = vsel %vm234, 1, 0
    %v237 = vsel %vm235, 1, 0
    %v238 = vcvt.s32.f32 %v236
    %v239 = vcvt.s32.f32 %v237
    %v240 = vadd.f32 %v238, %v239
    %241 = vadd.xlane.f32.xlu0 %v240
    %v242 = vpop.xlane.xlu0 %241
    %vm243 = vcmp.le.f32.partialorder %v242, 127.0
    %v244 = vsel %vm243, %v233, %v232
    %v245 = vor.u32 %v244, 32768
    %vm246 = vcmp.lt.s32.totalorder %v52, %v245
    %vm247 = vcmp.lt.s32.totalorder %v53, %v245
    %v248 = vsel %vm246, 1, 0
    %v249 = vsel %vm247, 1, 0
    %v250 = vcvt.s32.f32 %v248
    %v251 = vcvt.s32.f32 %v249
    %v252 = vadd.f32 %v250, %v251
    %253 = vadd.xlane.f32.xlu0 %v252
    %v254 = vpop.xlane.xlu0 %253
    %vm255 = vcmp.le.f32.partialorder %v254, 127.0
    %v256 = vsel %vm255, %v245, %v244
    %v257 = vor.u32 %v256, 16384
    %vm258 = vcmp.lt.s32.totalorder %v52, %v257
    %vm259 = vcmp.lt.s32.totalorder %v53, %v257
    %v260 = vsel %vm258, 1, 0
    %v261 = vsel %vm259, 1, 0
    %v262 = vcvt.s32.f32 %v260
    %v263 = vcvt.s32.f32 %v261
    %v264 = vadd.f32 %v262, %v263
    %265 = vadd.xlane.f32.xlu0 %v264
    %v266 = vpop.xlane.xlu0 %265
    %vm267 = vcmp.le.f32.partialorder %v266, 127.0
    %v268 = vsel %vm267, %v257, %v256
    %v269 = vor.u32 %v268, 8192
    %vm270 = vcmp.lt.s32.totalorder %v52, %v269
    %vm271 = vcmp.lt.s32.totalorder %v53, %v269
    %v272 = vsel %vm270, 1, 0
    %v273 = vsel %vm271, 1, 0
    %v274 = vcvt.s32.f32 %v272
    %v275 = vcvt.s32.f32 %v273
    %v276 = vadd.f32 %v274, %v275
    %277 = vadd.xlane.f32.xlu0 %v276
    %v278 = vpop.xlane.xlu0 %277
    %vm279 = vcmp.le.f32.partialorder %v278, 127.0
    %v280 = vsel %vm279, %v269, %v268
    %v281 = vor.u32 %v280, 4096
    %vm282 = vcmp.lt.s32.totalorder %v52, %v281
    %vm283 = vcmp.lt.s32.totalorder %v53, %v281
    %v284 = vsel %vm282, 1, 0
    %v285 = vsel %vm283, 1, 0
    %v286 = vcvt.s32.f32 %v284
    %v287 = vcvt.s32.f32 %v285
    %v288 = vadd.f32 %v286, %v287
    %289 = vadd.xlane.f32.xlu0 %v288
    %v290 = vpop.xlane.xlu0 %289
    %vm291 = vcmp.le.f32.partialorder %v290, 127.0
    %v292 = vsel %vm291, %v281, %v280
    %v293 = vor.u32 %v292, 2048
    %vm294 = vcmp.lt.s32.totalorder %v52, %v293
    %vm295 = vcmp.lt.s32.totalorder %v53, %v293
    %v296 = vsel %vm294, 1, 0
    %v297 = vsel %vm295, 1, 0
    %v298 = vcvt.s32.f32 %v296
    %v299 = vcvt.s32.f32 %v297
    %v300 = vadd.f32 %v298, %v299
    %301 = vadd.xlane.f32.xlu0 %v300
    %v302 = vpop.xlane.xlu0 %301
    %vm303 = vcmp.le.f32.partialorder %v302, 127.0
    %v304 = vsel %vm303, %v293, %v292
    %v305 = vor.u32 %v304, 1024
    %vm306 = vcmp.lt.s32.totalorder %v52, %v305
    %vm307 = vcmp.lt.s32.totalorder %v53, %v305
    %v308 = vsel %vm306, 1, 0
    %v309 = vsel %vm307, 1, 0
    %v310 = vcvt.s32.f32 %v308
    %v311 = vcvt.s32.f32 %v309
    %v312 = vadd.f32 %v310, %v311
    %313 = vadd.xlane.f32.xlu0 %v312
    %v314 = vpop.xlane.xlu0 %313
    %vm315 = vcmp.le.f32.partialorder %v314, 127.0
    %v316 = vsel %vm315, %v305, %v304
    %v317 = vor.u32 %v316, 512
    %vm318 = vcmp.lt.s32.totalorder %v52, %v317
    %vm319 = vcmp.lt.s32.totalorder %v53, %v317
    %v320 = vsel %vm318, 1, 0
    %v321 = vsel %vm319, 1, 0
    %v322 = vcvt.s32.f32 %v320
    %v323 = vcvt.s32.f32 %v321
    %v324 = vadd.f32 %v322, %v323
    %325 = vadd.xlane.f32.xlu0 %v324
    %v326 = vpop.xlane.xlu0 %325
    %vm327 = vcmp.le.f32.partialorder %v326, 127.0
    %v328 = vsel %vm327, %v317, %v316
    %v329 = vor.u32 %v328, 256
    %vm330 = vcmp.lt.s32.totalorder %v52, %v329
    %vm331 = vcmp.lt.s32.totalorder %v53, %v329
    %v332 = vsel %vm330, 1, 0
    %v333 = vsel %vm331, 1, 0
    %v334 = vcvt.s32.f32 %v332
    %v335 = vcvt.s32.f32 %v333
    %v336 = vadd.f32 %v334, %v335
    %337 = vadd.xlane.f32.xlu0 %v336
    %v338 = vpop.xlane.xlu0 %337
    %vm339 = vcmp.le.f32.partialorder %v338, 127.0
    %v340 = vsel %vm339, %v329, %v328
    %v341 = vor.u32 %v340, 128
    %vm342 = vcmp.lt.s32.totalorder %v52, %v341
    %vm343 = vcmp.lt.s32.totalorder %v53, %v341
    %v344 = vsel %vm342, 1, 0
    %v345 = vsel %vm343, 1, 0
    %v346 = vcvt.s32.f32 %v344
    %v347 = vcvt.s32.f32 %v345
    %v348 = vadd.f32 %v346, %v347
    %349 = vadd.xlane.f32.xlu0 %v348
    %v350 = vpop.xlane.xlu0 %349
    %vm351 = vcmp.le.f32.partialorder %v350, 127.0
    %v352 = vsel %vm351, %v341, %v340
    %v353 = vor.u32 %v352, 64
    %vm354 = vcmp.lt.s32.totalorder %v52, %v353
    %vm355 = vcmp.lt.s32.totalorder %v53, %v353
    %v356 = vsel %vm354, 1, 0
    %v357 = vsel %vm355, 1, 0
    %v358 = vcvt.s32.f32 %v356
    %v359 = vcvt.s32.f32 %v357
    %v360 = vadd.f32 %v358, %v359
    %361 = vadd.xlane.f32.xlu0 %v360
    %v362 = vpop.xlane.xlu0 %361
    %vm363 = vcmp.le.f32.partialorder %v362, 127.0
    %v364 = vsel %vm363, %v353, %v352
    %v365 = vor.u32 %v364, 32
    %vm366 = vcmp.lt.s32.totalorder %v52, %v365
    %vm367 = vcmp.lt.s32.totalorder %v53, %v365
    %v368 = vsel %vm366, 1, 0
    %v369 = vsel %vm367, 1, 0
    %v370 = vcvt.s32.f32 %v368
    %v371 = vcvt.s32.f32 %v369
    %v372 = vadd.f32 %v370, %v371
    %373 = vadd.xlane.f32.xlu0 %v372
    %v374 = vpop.xlane.xlu0 %373
    %vm375 = vcmp.le.f32.partialorder %v374, 127.0
    %v376 = vsel %vm375, %v365, %v364
    %v377 = vor.u32 %v376, 16
    %vm378 = vcmp.lt.s32.totalorder %v52, %v377
    %vm379 = vcmp.lt.s32.totalorder %v53, %v377
    %v380 = vsel %vm378, 1, 0
    %v381 = vsel %vm379, 1, 0
    %v382 = vcvt.s32.f32 %v380
    %v383 = vcvt.s32.f32 %v381
    %v384 = vadd.f32 %v382, %v383
    %385 = vadd.xlane.f32.xlu0 %v384
    %v386 = vpop.xlane.xlu0 %385
    %vm387 = vcmp.le.f32.partialorder %v386, 127.0
    %v388 = vsel %vm387, %v377, %v376
    %v389 = vor.u32 %v388, 8
    %vm390 = vcmp.lt.s32.totalorder %v52, %v389
    %vm391 = vcmp.lt.s32.totalorder %v53, %v389
    %v392 = vsel %vm390, 1, 0
    %v393 = vsel %vm391, 1, 0
    %v394 = vcvt.s32.f32 %v392
    %v395 = vcvt.s32.f32 %v393
    %v396 = vadd.f32 %v394, %v395
    %397 = vadd.xlane.f32.xlu0 %v396
    %v398 = vpop.xlane.xlu0 %397
    %vm399 = vcmp.le.f32.partialorder %v398, 127.0
    %v400 = vsel %vm399, %v389, %v388
    %v401 = vor.u32 %v400, 4
    %vm402 = vcmp.lt.s32.totalorder %v52, %v401
    %vm403 = vcmp.lt.s32.totalorder %v53, %v401
    %v404 = vsel %vm402, 1, 0
    %v405 = vsel %vm403, 1, 0
    %v406 = vcvt.s32.f32 %v404
    %v407 = vcvt.s32.f32 %v405
    %v408 = vadd.f32 %v406, %v407
    %409 = vadd.xlane.f32.xlu0 %v408
    %v410 = vpop.xlane.xlu0 %409
    %vm411 = vcmp.le.f32.partialorder %v410, 127.0
    %v412 = vsel %vm411, %v401, %v400
    %v413 = vor.u32 %v412, 2
    %vm414 = vcmp.lt.s32.totalorder %v52, %v413
    %vm415 = vcmp.lt.s32.totalorder %v53, %v413
    %v416 = vsel %vm414, 1, 0
    %v417 = vsel %vm415, 1, 0
    %v418 = vcvt.s32.f32 %v416
    %v419 = vcvt.s32.f32 %v417
    %v420 = vadd.f32 %v418, %v419
    %421 = vadd.xlane.f32.xlu0 %v420
    %v422 = vpop.xlane.xlu0 %421
    %vm423 = vcmp.le.f32.partialorder %v422, 127.0
    %v424 = vsel %vm423, %v413, %v412
    %v425 = vor.u32 %v424, 1
    %vm426 = vcmp.lt.s32.totalorder %v52, %v425
    %vm427 = vcmp.lt.s32.totalorder %v53, %v425
    %v428 = vsel %vm426, 1, 0
    %v429 = vsel %vm427, 1, 0
    %v430 = vcvt.s32.f32 %v428
    %v431 = vcvt.s32.f32 %v429
    %v432 = vadd.f32 %v430, %v431
    %433 = vadd.xlane.f32.xlu0 %v432
    %v434 = vpop.xlane.xlu0 %433
    %vm435 = vcmp.le.f32.partialorder %v434, 127.0
    %v436 = vsel %vm435, %v425, %v424
    %vm437 = vcmp.lt.s32.totalorder %v436, 0
    %v438 = vxor.u32 %v436, 2147483647
    %v439 = vsel %vm437, %v438, %v436
    %v441 = vld [vmem:[%s1] sm:$0xff]
    %v442 = vmul.f32 %v441, %v29
    %v443 = vmul.f32 %v441, %v45
    %445 = vrot.lane.b32.xlu0 %v443, 127
    %v446 = vpop.permute.xlu0 %445
    %v448 = vadd.f32 %v442, %v446
    %v449 = vmul.f32 %v441, %v439
    %451 = vrot.lane.b32.xlu0 %v449, 126
    %v452 = vpop.permute.xlu0 %451
    %v454 = vadd.f32 %v448, %v452
    %456 = vrot.lane.b32.xlu0 %v441, 125
    %v457 = vpop.permute.xlu0 %456
    %v459 = vadd.f32 %v454, %v457
    %v460 = vsub.f32 0.0, %v459
    %v461 = vmul.f32 %v460, 1.442695
    %v462 = vpow.pop %v461
    %v463 = vadd.f32 %v462, 1.0
    %v464 = vrcp.pop %v463
    %v465 = vmul.f32 1.0, %v464
    %467 = vset.pattern.permute.xlu0 0
    %468 = vperm.xlu0 %467, %v465
    %v469 = vpop.permute.xlu0 %468
    %v471 = vmul.f32 %v24, %v469
    %v472 = vmul.f32 %v25, %v469
    %473 = vst [vmem:[#allocation5] sm:$0xff] %v471
    %474 = vst [vmem:[#allocation5 + $0x8] sm:$0xff] %v472
    // Predicated region
    $region14: #{tpu_custom_call.1} parent=1 // pred_check
      _
    $region15: #{tpu_custom_call.1} parent=1 // pred_check_branch
      %476 = sbr.rel (0) target = $region17
    $region16: #{tpu_custom_call.1} parent=1 // pred_region
      %s478 = ssub.s32 256, 256
      %479 = vsyncadd [#allocation4], %s478
      %s481 = sshll.u32 [#allocation5], 4
      %s482 = int_to_ptr.vmem [resolvable:$true] %s481
      %484 = dma.vmem_to_hbm [thread:$0]  %s482, 256, %s2, [#allocation4]
    $region17: #{tpu_custom_call.1} parent=1 // pred_fallthru
      _
    // Predicated region
    $region18: #{tpu_custom_call.1} parent=1 // pred_check
      _
    $region19: #{tpu_custom_call.1} parent=1 // pred_check_branch
      %486 = sbr.rel (0) target = $region21
    $region20: #{tpu_custom_call.1} parent=1 // pred_region
      %487 = dma.done [#allocation4], 256
    $region21: #{tpu_custom_call.1} parent=1 // pred_fallthru
      _
    %488 = vsyncpa [#allocation3], 1
    %489 = vsyncpa [#allocation4], 1

</llo_original>
